<compile_context>
chip_gen: v7x
topology: tpu7x:2x2x1
jax: 0.10.0
libtpu: 0.0.40
codegen_flags: <defaults>
</compile_context>

<pallas_src>
import jax
import jax.numpy as jnp
import numpy as np
from jax.experimental import pallas as pl
from jax.experimental.pallas import tpu as pltpu


def _rnn_gate_kernel(x_ref, state_in_ref, w_ih_ref, w_hh_ref, slab_ref,
                     bi_prob_ref, action_ref, state_out_ref):
    t = pl.program_id(0)
    H = state_out_ref.shape[-1]

    # Initialize the resident recurrent state from the input state at step 0.
    # state_out_ref has a constant block index across the grid, so it stays in
    # VMEM for all T steps and is written back to HBM once at the end.
    @pl.when(t == 0)
    def _():
        state_out_ref[...] = state_in_ref[...]

    h = state_out_ref[0]                               # (B, H) f32
    c = state_out_ref[1]                               # (B, H) f32
    x = x_ref[0]                                       # (B, in) f32

    # Packed small params (single lane-dense slab, resident across steps).
    b_fused = slab_ref[0:1, :]                         # (1, 4H)
    w_proj = slab_ref[1:2, 0:H]                        # (1, H)
    b_proj = slab_ref[2:3, 0:1]                        # (1, 1)

    # LSTM pre-activation: bf16 weights (resident), f32 accumulation.
    gates = (jnp.dot(x.astype(jnp.bfloat16), w_ih_ref[...],
                     preferred_element_type=jnp.float32)
             + jnp.dot(h.astype(jnp.bfloat16), w_hh_ref[...],
                       preferred_element_type=jnp.float32)
             + b_fused)                                # (B, 4H)

    # PyTorch gate order: i, f, g, o (slices along the lane axis).
    i_g = jax.nn.sigmoid(gates[:, 0 * H:1 * H])
    f_g = jax.nn.sigmoid(gates[:, 1 * H:2 * H])
    g_g = jnp.tanh(gates[:, 2 * H:3 * H])
    o_g = jax.nn.sigmoid(gates[:, 3 * H:4 * H])

    c_new = f_g * c + i_g * g_g
    h_new = o_g * jnp.tanh(c_new)

    # Projection: VPU multiply + lane reduction instead of an N=1 MXU matmul.
    logit = jnp.sum(h_new * w_proj, axis=-1, keepdims=True) + b_proj   # (B, 1)
    prob = jax.nn.sigmoid(logit)

    # Epilogue folded into the kernel: bi_prob and thresholded action.
    bi_prob_ref[0, :, 0:1] = 1.0 - prob
    bi_prob_ref[0, :, 1:2] = prob
    action_ref[0] = (prob > 0.5).astype(jnp.float32)

    # Carry the packed recurrent state to the next step (in VMEM).
    state_out_ref[0] = h_new
    state_out_ref[1] = c_new


def rnn_gate_forward_steps(xs_nchw, state, params):
    """Run T sequential gate invocations in a single pallas_call.

    xs_nchw: (T, B, C, Hs, Ws) float32 — one x per forward() call.
    state:   packed recurrent state (2, B, hidden_dim) = [h; c].
    Returns (action (T,B,1,1,1), bi_prob (T,B,2), new_state (2,B,hidden_dim)).
    """
    T, B = xs_nchw.shape[0], xs_nchw.shape[1]
    xs = xs_nchw.reshape(T, B, -1).astype(jnp.float32)  # x.view(1, B, -1) per step
    in_dim = xs.shape[-1]
    Hd = state.shape[-1]

    out_shapes = (
        jax.ShapeDtypeStruct((T, B, 2), jnp.float32),    # bi_prob per step
        jax.ShapeDtypeStruct((T, B, 1), jnp.float32),    # action per step
        jax.ShapeDtypeStruct((2, B, Hd), jnp.float32),   # final packed [h'; c']
    )
    in_specs = [
        pl.BlockSpec((1, B, in_dim), lambda t: (t, 0, 0)),   # per-step x
        pl.BlockSpec((2, B, Hd), lambda t: (0, 0, 0)),       # initial state (DMA once)
        pl.BlockSpec((in_dim, 4 * Hd), lambda t: (0, 0)),    # w_ih^T, resident
        pl.BlockSpec((Hd, 4 * Hd), lambda t: (0, 0)),        # w_hh^T, resident
        pl.BlockSpec((3, 4 * Hd), lambda t: (0, 0)),         # packed small params
    ]
    out_specs = (
        pl.BlockSpec((1, B, 2), lambda t: (t, 0, 0)),
        pl.BlockSpec((1, B, 1), lambda t: (t, 0, 0)),
        pl.BlockSpec((2, B, Hd), lambda t: (0, 0, 0)),       # revisited: state carry
    )

    bi_prob, action, new_state = pl.pallas_call(
        _rnn_gate_kernel,
        out_shape=out_shapes,
        grid=(T,),
        in_specs=in_specs,
        out_specs=out_specs,
        compiler_params=pltpu.CompilerParams(
            dimension_semantics=("arbitrary",)),   # steps are sequential (state carry)
    )(xs, state, params["w_ihT"], params["w_hhT"], params["slab"])

    action = action.reshape(T, B, 1, 1, 1)   # metadata-only reshape
    return action, bi_prob, new_state


def rnn_gate_forward(x_nchw, state, params):
    """Single forward() call of the module (T = 1)."""
    action, bi_prob, new_state = rnn_gate_forward_steps(x_nchw[None], state, params)
    return action[0], bi_prob[0], new_state


def init_hidden(batch_size, hidden_dim):
    """Packed (2, B, H) zeros == the module's (h, c) of zeros (1, B, H) each."""
    return jnp.zeros((2, batch_size, hidden_dim), jnp.float32)


def make_params(key, input_dim, hidden_dim):
    """Deterministic init mimicking PyTorch's U(-1/sqrt(H), 1/sqrt(H))."""
    ks = jax.random.split(key, 6)
    bound = 1.0 / np.sqrt(hidden_dim)
    u = lambda k, shape: jax.random.uniform(k, shape, jnp.float32, -bound, bound)
    # PyTorch: weight_ih_l0 (4H, in), weight_hh_l0 (4H, H), biases (4H,)
    w_ih = u(ks[0], (4 * hidden_dim, input_dim))
    w_hh = u(ks[1], (4 * hidden_dim, hidden_dim))
    b_ih = u(ks[2], (4 * hidden_dim,))
    b_hh = u(ks[3], (4 * hidden_dim,))
    w_proj = u(ks[4], (1, hidden_dim))
    b_proj = u(ks[5], (1,))
    # bf16 weight storage: halves the dominant HBM transfer; MXU-native input.
    w_ihT = w_ih.T.astype(jnp.bfloat16)                 # (in, 4H)
    w_hhT = w_hh.T.astype(jnp.bfloat16)                 # (H, 4H)
    # Single lane-dense (3, 4H) f32 slab of small params.
    slab = jnp.zeros((3, 4 * hidden_dim), jnp.float32)
    slab = slab.at[0, :].set(b_ih + b_hh)
    slab = slab.at[1, :hidden_dim].set(w_proj[0])
    slab = slab.at[2, 0].set(b_proj[0])
    return {
        "w_ihT": w_ihT,
        "w_hhT": w_hhT,
        "slab": slab,
        # raw f32 copies for the pure-JAX reference check
        "_raw": (w_ih, w_hh, b_ih, b_hh, w_proj, b_proj),
    }


def _reference_steps(xs_nchw, state, params):
    """Pure-JAX f32 reference: T sequential module forward() calls."""
    w_ih, w_hh, b_ih, b_hh, w_proj, b_proj = params["_raw"]
    T, B = xs_nchw.shape[0], xs_nchw.shape[1]
    x_flat = xs_nchw.reshape(T, B, -1)
    h, c = state[0], state[1]
    Hd = h.shape[-1]
    hp = jax.lax.Precision.HIGHEST
    bi_probs, actions = [], []
    for t in range(T):
        gates = (jnp.dot(x_flat[t], w_ih.T, precision=hp) + b_ih
                 + jnp.dot(h, w_hh.T, precision=hp) + b_hh)
        i, f, g, o = [gates[:, k * Hd:(k + 1) * Hd] for k in range(4)]
        i, f = jax.nn.sigmoid(i), jax.nn.sigmoid(f)
        g, o = jnp.tanh(g), jax.nn.sigmoid(o)
        c = f * c + i * g
        h = o * jnp.tanh(c)
        prob = jax.nn.sigmoid(jnp.dot(h, w_proj.T, precision=hp) + b_proj)
        bi_probs.append(jnp.concatenate([1.0 - prob, prob], axis=1))
        actions.append((prob > 0.5).astype(jnp.float32))
    return (jnp.stack(actions).reshape(T, B, 1, 1, 1),
            jnp.stack(bi_probs),
            jnp.stack([h, c], axis=0))


if __name__ == "__main__":
    key = jax.random.PRNGKey(0)
    k_x, k_p = jax.random.split(key, 2)

    T = 8                                  # sequential gate invocations amortized
    batch, C, Hs, Ws = 2, 4, 16, 16        # x.view(1, B, -1) -> input_dim = 1024
    input_dim = C * Hs * Ws
    hidden_dim = 32                        # 4H = 128 -> exactly one vreg lane width

    xs = jax.random.normal(k_x, (T, batch, C, Hs, Ws), dtype=jnp.float32)
    params = make_params(k_p, input_dim, hidden_dim)
    state0 = init_hidden(batch, hidden_dim)

    action, bi_prob, new_state = rnn_gate_forward_steps(xs, state0, params)
    jax.block_until_ready((action, bi_prob, new_state))

    # Correctness vs pure-JAX f32 reference (bf16 weights -> relaxed tolerance).
    ref_action, ref_bi_prob, ref_state = _reference_steps(xs, state0, params)
    np.testing.assert_allclose(np.asarray(bi_prob), np.asarray(ref_bi_prob), atol=3e-2)
    np.testing.assert_allclose(np.asarray(new_state), np.asarray(ref_state), atol=3e-2)

    # Action: exact internal consistency with the kernel's own prob ...
    k_prob = np.asarray(bi_prob)[..., 1]
    a_k = np.asarray(action).reshape(T, batch)
    np.testing.assert_array_equal(a_k, (k_prob > 0.5).astype(np.float32))
    # ... and agreement with the f32 reference wherever the decision is decisive.
    r_prob = np.asarray(ref_bi_prob)[..., 1]
    a_r = np.asarray(ref_action).reshape(T, batch)
    decisive = np.abs(r_prob - 0.5) > 0.05
    np.testing.assert_array_equal(a_k[decisive], a_r[decisive])

    print("KERNEL_OK")
</pallas_src>

<mosaic_0001>
module attributes {stable_mosaic.version = 11 : i64} {
  func.func @_rnn_gate_kernel(%arg0: i32, %arg1: memref<1x2x1024xf32, #tpu.memory_space<vmem>>, %arg2: memref<2x2x32xf32, #tpu.memory_space<vmem>>, %arg3: memref<1024x128xbf16, #tpu.memory_space<vmem>>, %arg4: memref<32x128xbf16, #tpu.memory_space<vmem>>, %arg5: memref<3x128xf32, #tpu.memory_space<vmem>>, %arg6: memref<1x2x2xf32, #tpu.memory_space<vmem>>, %arg7: memref<1x2x1xf32, #tpu.memory_space<vmem>>, %arg8: memref<2x2x32xf32, #tpu.memory_space<vmem>>) attributes {dimension_semantics = [#tpu.dimension_semantics<arbitrary>], iteration_bounds = array<i64: 8>, scalar_prefetch = 0 : i64, scratch_operands = 0 : i64, tpu.core_type = #tpu.core_type<tc>, window_params = [{transform_indices = @transform_0, window_bounds = array<i64: 1, 2, 1024>}, {pipeline_mode = #tpu.pipeline_mode<synchronous>, transform_indices = @transform_1, window_bounds = array<i64: 2, 2, 32>}, {pipeline_mode = #tpu.pipeline_mode<synchronous>, transform_indices = @transform_2, window_bounds = array<i64: 1024, 128>}, {pipeline_mode = #tpu.pipeline_mode<synchronous>, transform_indices = @transform_3, window_bounds = array<i64: 32, 128>}, {pipeline_mode = #tpu.pipeline_mode<synchronous>, transform_indices = @transform_4, window_bounds = array<i64: 3, 128>}, {transform_indices = @transform_5, window_bounds = array<i64: 1, 2, 2>}, {transform_indices = @transform_6, window_bounds = array<i64: 1, 2, 1>}, {pipeline_mode = #tpu.pipeline_mode<synchronous>, transform_indices = @transform_7, window_bounds = array<i64: 2, 2, 32>}]} {
    %c0_i32 = arith.constant 0 : i32
    %0 = arith.cmpi eq, %arg0, %c0_i32 : i32
    %1 = arith.extui %0 : i1 to i32
    %c0_i32_0 = arith.constant 0 : i32
    %2 = arith.cmpi ne, %1, %c0_i32_0 : i32
    scf.if %2 {
      %c0_40 = arith.constant 0 : index
      %c0_41 = arith.constant 0 : index
      %c0_42 = arith.constant 0 : index
      %78 = vector.load %arg2[%c0_40, %c0_41, %c0_42] : memref<2x2x32xf32, #tpu.memory_space<vmem>>, vector<2x2x32xf32>
      %c0_43 = arith.constant 0 : index
      %c0_44 = arith.constant 0 : index
      %c0_45 = arith.constant 0 : index
      %79 = vector.load %arg8[%c0_43, %c0_44, %c0_45] : memref<2x2x32xf32, #tpu.memory_space<vmem>>, vector<2x2x32xf32>
      tpu.vector_store %arg8[%c0_43, %c0_44, %c0_45], %78 {strides = array<i32>} : memref<2x2x32xf32, #tpu.memory_space<vmem>>, vector<2x2x32xf32>,
    } else {
    }
    %c0 = arith.constant 0 : index
    %c0_1 = arith.constant 0 : index
    %c0_2 = arith.constant 0 : index
    %3 = vector.load %arg8[%c0, %c0_1, %c0_2] : memref<2x2x32xf32, #tpu.memory_space<vmem>>, vector<1x2x32xf32>
    %4 = vector.shape_cast %3 : vector<1x2x32xf32> to vector<2x32xf32>
    %c1 = arith.constant 1 : index
    %c0_3 = arith.constant 0 : index
    %c0_4 = arith.constant 0 : index
    %5 = vector.load %arg8[%c1, %c0_3, %c0_4] : memref<2x2x32xf32, #tpu.memory_space<vmem>>, vector<1x2x32xf32>
    %6 = vector.shape_cast %5 : vector<1x2x32xf32> to vector<2x32xf32>
    %c0_5 = arith.constant 0 : index
    %c0_6 = arith.constant 0 : index
    %c0_7 = arith.constant 0 : index
    %7 = vector.load %arg1[%c0_5, %c0_6, %c0_7] : memref<1x2x1024xf32, #tpu.memory_space<vmem>>, vector<1x2x1024xf32>
    %8 = vector.shape_cast %7 : vector<1x2x1024xf32> to vector<2x1024xf32>
    %c0_8 = arith.constant 0 : index
    %c0_9 = arith.constant 0 : index
    %9 = vector.load %arg5[%c0_8, %c0_9] : memref<3x128xf32, #tpu.memory_space<vmem>>, vector<1x128xf32>
    %c1_10 = arith.constant 1 : index
    %c0_11 = arith.constant 0 : index
    %10 = vector.load %arg5[%c1_10, %c0_11] : memref<3x128xf32, #tpu.memory_space<vmem>>, vector<1x32xf32>
    %c2 = arith.constant 2 : index
    %c0_12 = arith.constant 0 : index
    %11 = vector.load %arg5[%c2, %c0_12] : memref<3x128xf32, #tpu.memory_space<vmem>>, vector<1x1xf32>
    %12 = arith.truncf %8 : vector<2x1024xf32> to vector<2x1024xbf16>
    %c0_13 = arith.constant 0 : index
    %c0_14 = arith.constant 0 : index
    %13 = vector.load %arg3[%c0_13, %c0_14] : memref<1024x128xbf16, #tpu.memory_space<vmem>>, vector<1024x128xbf16>
    %cst = arith.constant dense<0.000000e+00> : vector<2x128xf32>
    %14 = tpu.matmul %12, %13, %cst {dimension_numbers = #tpu.dot_dimension_numbers<[1], [0], [0], [1], [0, 0, 1, 1], [], []>} : vector<2x1024xbf16>, vector<1024x128xbf16>, vector<2x128xf32> -> vector<2x128xf32>
    %15 = arith.truncf %4 : vector<2x32xf32> to vector<2x32xbf16>
    %c0_15 = arith.constant 0 : index
    %c0_16 = arith.constant 0 : index
    %16 = vector.load %arg4[%c0_15, %c0_16] : memref<32x128xbf16, #tpu.memory_space<vmem>>, vector<32x128xbf16>
    %cst_17 = arith.constant dense<0.000000e+00> : vector<2x128xf32>
    %17 = tpu.matmul %15, %16, %cst_17 {dimension_numbers = #tpu.dot_dimension_numbers<[1], [0], [0], [1], [0, 0, 1, 1], [], []>} : vector<2x32xbf16>, vector<32x128xbf16>, vector<2x128xf32> -> vector<2x128xf32>
    %18 = arith.addf %14, %17 : vector<2x128xf32>
    %19 = vector.broadcast %9 : vector<1x128xf32> to vector<2x128xf32>
    %20 = arith.addf %18, %19 : vector<2x128xf32>
    %21 = vector.extract_strided_slice %20 {offsets = [0, 0], sizes = [2, 32], strides = [1, 1]} : vector<2x128xf32> to vector<2x32xf32>
    %22 = arith.negf %21 : vector<2x32xf32>
    %23 = math.exp %22 : vector<2x32xf32>
    %cst_18 = arith.constant 1.000000e+00 : f32
    %24 = vector.broadcast %cst_18 : f32 to vector<2x32xf32>
    %25 = arith.addf %24, %23 : vector<2x32xf32>
    %26 = arith.divf %24, %25 : vector<2x32xf32>
    %27 = vector.extract_strided_slice %20 {offsets = [0, 32], sizes = [2, 32], strides = [1, 1]} : vector<2x128xf32> to vector<2x32xf32>
    %28 = arith.negf %27 : vector<2x32xf32>
    %29 = math.exp %28 : vector<2x32xf32>
    %cst_19 = arith.constant 1.000000e+00 : f32
    %30 = vector.broadcast %cst_19 : f32 to vector<2x32xf32>
    %31 = arith.addf %30, %29 : vector<2x32xf32>
    %32 = arith.divf %30, %31 : vector<2x32xf32>
    %33 = vector.extract_strided_slice %20 {offsets = [0, 64], sizes = [2, 32], strides = [1, 1]} : vector<2x128xf32> to vector<2x32xf32>
    %34 = math.tanh %33 : vector<2x32xf32>
    %35 = vector.extract_strided_slice %20 {offsets = [0, 96], sizes = [2, 32], strides = [1, 1]} : vector<2x128xf32> to vector<2x32xf32>
    %36 = arith.negf %35 : vector<2x32xf32>
    %37 = math.exp %36 : vector<2x32xf32>
    %cst_20 = arith.constant 1.000000e+00 : f32
    %38 = vector.broadcast %cst_20 : f32 to vector<2x32xf32>
    %39 = arith.addf %38, %37 : vector<2x32xf32>
    %40 = arith.divf %38, %39 : vector<2x32xf32>
    %41 = arith.mulf %32, %6 : vector<2x32xf32>
    %42 = arith.mulf %26, %34 : vector<2x32xf32>
    %43 = arith.addf %41, %42 : vector<2x32xf32>
    %44 = math.tanh %43 : vector<2x32xf32>
    %45 = arith.mulf %40, %44 : vector<2x32xf32>
    %46 = vector.broadcast %10 : vector<1x32xf32> to vector<2x32xf32>
    %47 = arith.mulf %45, %46 : vector<2x32xf32>
    %cst_21 = arith.constant dense<0.000000e+00> : vector<2xf32>
    %48 = vector.multi_reduction <add>, %47, %cst_21 [1] : vector<2x32xf32> to vector<2xf32>
    %49 = vector.shape_cast %48 : vector<2xf32> to vector<2x1xf32>
    %50 = vector.broadcast %11 : vector<1x1xf32> to vector<2x1xf32>
    %51 = arith.addf %49, %50 : vector<2x1xf32>
    %52 = arith.negf %51 : vector<2x1xf32>
    %53 = math.exp %52 : vector<2x1xf32>
    %cst_22 = arith.constant 1.000000e+00 : f32
    %54 = vector.broadcast %cst_22 : f32 to vector<2x1xf32>
    %55 = arith.addf %54, %53 : vector<2x1xf32>
    %56 = arith.divf %54, %55 : vector<2x1xf32>
    %cst_23 = arith.constant 1.000000e+00 : f32
    %57 = vector.broadcast %cst_23 : f32 to vector<2x1xf32>
    %58 = arith.subf %57, %56 : vector<2x1xf32>
    %c0_24 = arith.constant 0 : index
    %c0_25 = arith.constant 0 : index
    %c0_26 = arith.constant 0 : index
    %59 = vector.load %arg6[%c0_24, %c0_25, %c0_26] : memref<1x2x2xf32, #tpu.memory_space<vmem>>, vector<1x2x1xf32>
    %60 = vector.shape_cast %59 : vector<1x2x1xf32> to vector<2x1xf32>
    %61 = vector.shape_cast %58 : vector<2x1xf32> to vector<1x2x1xf32>
    tpu.vector_store %arg6[%c0_24, %c0_25, %c0_26], %61 {strides = array<i32>} : memref<1x2x2xf32, #tpu.memory_space<vmem>>, vector<1x2x1xf32>,
    %c0_27 = arith.constant 0 : index
    %c0_28 = arith.constant 0 : index
    %c1_29 = arith.constant 1 : index
    %62 = vector.load %arg6[%c0_27, %c0_28, %c1_29] : memref<1x2x2xf32, #tpu.memory_space<vmem>>, vector<1x2x1xf32>
    %63 = vector.shape_cast %62 : vector<1x2x1xf32> to vector<2x1xf32>
    %64 = vector.shape_cast %56 : vector<2x1xf32> to vector<1x2x1xf32>
    tpu.vector_store %arg6[%c0_27, %c0_28, %c1_29], %64 {strides = array<i32>} : memref<1x2x2xf32, #tpu.memory_space<vmem>>, vector<1x2x1xf32>,
    %cst_30 = arith.constant 5.000000e-01 : f32
    %65 = vector.broadcast %cst_30 : f32 to vector<2x1xf32>
    %66 = arith.cmpf ogt, %56, %65 : vector<2x1xf32>
    %67 = arith.extui %66 : vector<2x1xi1> to vector<2x1xi32>
    %68 = arith.sitofp %67 : vector<2x1xi32> to vector<2x1xf32>
    %c0_31 = arith.constant 0 : index
    %c0_32 = arith.constant 0 : index
    %c0_33 = arith.constant 0 : index
    %69 = vector.load %arg7[%c0_31, %c0_32, %c0_33] : memref<1x2x1xf32, #tpu.memory_space<vmem>>, vector<1x2x1xf32>
    %70 = vector.shape_cast %69 : vector<1x2x1xf32> to vector<2x1xf32>
    %71 = vector.shape_cast %68 : vector<2x1xf32> to vector<1x2x1xf32>
    tpu.vector_store %arg7[%c0_31, %c0_32, %c0_33], %71 {strides = array<i32>} : memref<1x2x1xf32, #tpu.memory_space<vmem>>, vector<1x2x1xf32>,
    %c0_34 = arith.constant 0 : index
    %c0_35 = arith.constant 0 : index
    %c0_36 = arith.constant 0 : index
    %72 = vector.load %arg8[%c0_34, %c0_35, %c0_36] : memref<2x2x32xf32, #tpu.memory_space<vmem>>, vector<1x2x32xf32>
    %73 = vector.shape_cast %72 : vector<1x2x32xf32> to vector<2x32xf32>
    %74 = vector.shape_cast %45 : vector<2x32xf32> to vector<1x2x32xf32>
    tpu.vector_store %arg8[%c0_34, %c0_35, %c0_36], %74 {strides = array<i32>} : memref<2x2x32xf32, #tpu.memory_space<vmem>>, vector<1x2x32xf32>,
    %c1_37 = arith.constant 1 : index
    %c0_38 = arith.constant 0 : index
    %c0_39 = arith.constant 0 : index
    %75 = vector.load %arg8[%c1_37, %c0_38, %c0_39] : memref<2x2x32xf32, #tpu.memory_space<vmem>>, vector<1x2x32xf32>
    %76 = vector.shape_cast %75 : vector<1x2x32xf32> to vector<2x32xf32>
    %77 = vector.shape_cast %43 : vector<2x32xf32> to vector<1x2x32xf32>
    tpu.vector_store %arg8[%c1_37, %c0_38, %c0_39], %77 {strides = array<i32>} : memref<2x2x32xf32, #tpu.memory_space<vmem>>, vector<1x2x32xf32>,
    return
  }
  func.func @transform_0(%arg0: i32) -> (i32, i32, i32) {
    %c0_i32 = arith.constant 0 : i32
    %c0_i32_0 = arith.constant 0 : i32
    %c0_i32_1 = arith.constant 0 : i32
    return %arg0, %c0_i32, %c0_i32_0 : i32, i32, i32
  }
  func.func @transform_1(%arg0: i32) -> (i32, i32, i32) {
    %c0_i32 = arith.constant 0 : i32
    %c0_i32_0 = arith.constant 0 : i32
    %c0_i32_1 = arith.constant 0 : i32
    %c0_i32_2 = arith.constant 0 : i32
    return %c0_i32, %c0_i32_0, %c0_i32_1 : i32, i32, i32
  }
  func.func @transform_2(%arg0: i32) -> (i32, i32) {
    %c0_i32 = arith.constant 0 : i32
    %c0_i32_0 = arith.constant 0 : i32
    %c0_i32_1 = arith.constant 0 : i32
    return %c0_i32, %c0_i32_0 : i32, i32
  }
  func.func @transform_3(%arg0: i32) -> (i32, i32) {
    %c0_i32 = arith.constant 0 : i32
    %c0_i32_0 = arith.constant 0 : i32
    %c0_i32_1 = arith.constant 0 : i32
    return %c0_i32, %c0_i32_0 : i32, i32
  }
  func.func @transform_4(%arg0: i32) -> (i32, i32) {
    %c0_i32 = arith.constant 0 : i32
    %c0_i32_0 = arith.constant 0 : i32
    %c0_i32_1 = arith.constant 0 : i32
    return %c0_i32, %c0_i32_0 : i32, i32
  }
  func.func @transform_5(%arg0: i32) -> (i32, i32, i32) {
    %c0_i32 = arith.constant 0 : i32
    %c0_i32_0 = arith.constant 0 : i32
    %c0_i32_1 = arith.constant 0 : i32
    return %arg0, %c0_i32, %c0_i32_0 : i32, i32, i32
  }
  func.func @transform_6(%arg0: i32) -> (i32, i32, i32) {
    %c0_i32 = arith.constant 0 : i32
    %c0_i32_0 = arith.constant 0 : i32
    %c0_i32_1 = arith.constant 0 : i32
    return %arg0, %c0_i32, %c0_i32_0 : i32, i32, i32
  }
  func.func @transform_7(%arg0: i32) -> (i32, i32, i32) {
    %c0_i32 = arith.constant 0 : i32
    %c0_i32_0 = arith.constant 0 : i32
    %c0_i32_1 = arith.constant 0 : i32
    %c0_i32_2 = arith.constant 0 : i32
    return %c0_i32, %c0_i32_0, %c0_i32_1 : i32, i32, i32
  }
}

</mosaic_0001>

<llo_original>
// kernel: tpu_custom_call.1
$region0: #{tpu_custom_call.1}
  #allocation0 [shape = 'u32[]', space=smem, size = 0x4, offset = 0x4, fixed_abs, tag = 'smem constant byte address 0x4 - core index']
  #allocation1 [shape = 'u32[144,128]{1,0:T(1,128)}', space=vmem, size = 0x12000, scoped, tag = 'internal scratch']
  %s0 = inlined_call_operand.hbm [shape: f32[8,2,1024], index: 0, kind: input, shape index: {}]
  %s1 = inlined_call_operand.hbm [shape: f32[2,2,32], index: 1, kind: input, shape index: {}]
  %s2 = inlined_call_operand.hbm [shape: bf16[1024,128], index: 2, kind: input, shape index: {}]
  %s3 = inlined_call_operand.hbm [shape: bf16[32,128], index: 3, kind: input, shape index: {}]
  %s4 = inlined_call_operand.vmem [shape: f32[3,128], index: 4, kind: input, shape index: {}]
  %s5 = inlined_call_operand.vmem [shape: f32[8,2,2], index: 5, kind: output, shape index: {0}]
  %s6 = inlined_call_operand.vmem [shape: f32[8,2,1], index: 6, kind: output, shape index: {1}]
  %s7 = inlined_call_operand.hbm [shape: f32[2,2,32], index: 7, kind: output, shape index: {2}]
  %8 = xla_tuple %s5, %s6, %s7
  %s9 = sld [smem:[#allocation0]]
  $region89: #{tpu_custom_call.1} parent=0
    _
  %s11 = ssub.s32 1, %s9
  %s12 = scalar_select 0, %s11, %s9
  $region1: #{tpu_custom_call.1} parent=0
    #allocation2 [shape = 'u8[16384]{0}', space=vmem, size = 0x4000, scoped, tag = 'input window, operand 0']
    #allocation3 [shape = 's32[2]{0}', space=sflag, size = 0x8, scoped, tag = 'scoped memory for tpu_custom_call.1']
    #allocation4 [shape = 's32[2]{0}', space=sflag, size = 0x8, scoped, tag = 'scoped memory for tpu_custom_call.1']
    #allocation5 [shape = 'u8[2048]{0}', space=vmem, size = 0x800, scoped, tag = 'input window, operand 1, single buffered']
    #allocation6 [shape = 's32[1]{0}', space=sflag, size = 0x4, scoped, tag = 'scoped memory for tpu_custom_call.1']
    #allocation7 [shape = 'u8[262144]{0}', space=vmem, size = 0x40000, scoped, tag = 'input window, operand 2, single buffered']
    #allocation8 [shape = 'u8[8192]{0}', space=vmem, size = 0x2000, scoped, tag = 'input window, operand 3, single buffered']
    #allocation9 [shape = 's32[1]{0}', space=sflag, size = 0x4, scoped, tag = 'scoped memory for tpu_custom_call.1']
    #allocation10 [shape = 'u8[2048]{0}', space=vmem, size = 0x800, scoped, tag = 'output window, operand 2, single buffered']
    %13 = vsyncpa [#allocation3], 0
    %s14 = scalar_lea.sflag [#allocation3], 1
    %15 = vsyncpa %s14, 0
    %16 = vsyncpa [#allocation6], 0
    %17 = vsyncpa [#allocation9], 0
    %18 = vsyncpa [#allocation4], 0
    loop: start=0, step=1, limit=10
    $region2: #{tpu_custom_call.1} parent=1 // loop_pre_header
      _
    $region3: #{tpu_custom_call.1} parent=1 // loop_header
      %s20 = sphi 0, %s24
      %p21 = scmp.ge.s32.totalorder %s20, 10
      %s30 = sphi 0, %s32
      %s33 = sphi 0, %s30
      %s34 = sphi 0, %s33
      %s50 = sphi 0, %s34
      %s54 = sphi 0, %s54
      %s56 = sphi 0, %s54
      %s57 = sphi 0, %s56
      %s71 = sphi 0, %s57
      %s75 = sphi 0, %s75
      %s77 = sphi 0, %s75
      %s78 = sphi 0, %s77
      %s92 = sphi 0, %s78
      %s96 = sphi 0, %s96
      %s98 = sphi 0, %s96
      %s99 = sphi 0, %s98
      %s113 = sphi 0, %s99
      %s117 = sphi 0, %s117
      %s119 = sphi 0, %s117
      %s120 = sphi 0, %s119
      %s134 = sphi 0, %s120
      %s140 = sphi 0, %s142
      %s143 = sphi 0, %s140
      %s144 = sphi 0, %s143
      %s160 = sphi 0, %s144
      %s166 = sphi 0, %s168
      %s169 = sphi 0, %s166
      %s170 = sphi 0, %s169
      %s186 = sphi 0, %s170
      %s190 = sphi 0, %s190
      %s192 = sphi 0, %s190
      %s193 = sphi 0, %s192
      %s207 = sphi 0, %s193
    $region4: #{tpu_custom_call.1} parent=1 // loop_header_branch
      %23 = sbr.rel (%p21) target = $region8
    $region5: #{tpu_custom_call.1} parent=1 // loop_body
      %s25 = ssub.s32 %s20, 1
      %s26 = ssub.s32 %s20, 2
      %s27 = sadd.s32 %s20, 1
      %s28 = ssub.s32 %s20, %s27
      %p29 = scmp.eq.s32.totalorder %s28, 0
      %s31 = sadd.s32 %s30, 1
      %s32 = scalar_select %p29, %s30, %s31
      %p35 = pneg %p29
      %p36 = scmp.eq.s32.totalorder %s20, 7
      %p37 = por %p35, %p36
      %p38 = scmp.ne.s32.totalorder %s30, %s33
      %p39 = scmp.eq.s32.totalorder %s20, 0
      %p40 = por %p38, %p39
      %p41 = scmp.ne.s32.totalorder %s30, %s33
      %p42 = scmp.eq.s32.totalorder %s25, 7
      %p43 = por %p41, %p42
      %p44 = scmp.ne.s32.totalorder %s33, %s34
      %p45 = scmp.eq.s32.totalorder %s25, 0
      %p46 = por %p44, %p45
      %p47 = scmp.ne.s32.totalorder %s33, %s34
      %p48 = scmp.eq.s32.totalorder %s26, 7
      %p49 = por %p47, %p48
      %p51 = scmp.ne.s32.totalorder %s34, %s50
      %p52 = scmp.eq.s32.totalorder %s26, 0
      %p53 = por %p51, %p52
      %s55 = sadd.s32 %s54, 1
      %p58 = scmp.eq.s32.totalorder %s20, 7
      %p59 = scmp.ne.s32.totalorder %s54, %s56
      %p60 = scmp.eq.s32.totalorder %s20, 0
      %p61 = por %p59, %p60
      %p62 = scmp.ne.s32.totalorder %s54, %s56
      %p63 = scmp.eq.s32.totalorder %s25, 7
      %p64 = por %p62, %p63
      %p65 = scmp.ne.s32.totalorder %s56, %s57
      %p66 = scmp.eq.s32.totalorder %s25, 0
      %p67 = por %p65, %p66
      %p68 = scmp.ne.s32.totalorder %s56, %s57
      %p69 = scmp.eq.s32.totalorder %s26, 7
      %p70 = por %p68, %p69
      %p72 = scmp.ne.s32.totalorder %s57, %s71
      %p73 = scmp.eq.s32.totalorder %s26, 0
      %p74 = por %p72, %p73
      %s76 = sadd.s32 %s75, 1
      %p79 = scmp.eq.s32.totalorder %s20, 7
      %p80 = scmp.ne.s32.totalorder %s75, %s77
      %p81 = scmp.eq.s32.totalorder %s20, 0
      %p82 = por %p80, %p81
      %p83 = scmp.ne.s32.totalorder %s75, %s77
      %p84 = scmp.eq.s32.totalorder %s25, 7
      %p85 = por %p83, %p84
      %p86 = scmp.ne.s32.totalorder %s77, %s78
      %p87 = scmp.eq.s32.totalorder %s25, 0
      %p88 = por %p86, %p87
      %p89 = scmp.ne.s32.totalorder %s77, %s78
      %p90 = scmp.eq.s32.totalorder %s26, 7
      %p91 = por %p89, %p90
      %p93 = scmp.ne.s32.totalorder %s78, %s92
      %p94 = scmp.eq.s32.totalorder %s26, 0
      %p95 = por %p93, %p94
      %s97 = sadd.s32 %s96, 1
      %p100 = scmp.eq.s32.totalorder %s20, 7
      %p101 = scmp.ne.s32.totalorder %s96, %s98
      %p102 = scmp.eq.s32.totalorder %s20, 0
      %p103 = por %p101, %p102
      %p104 = scmp.ne.s32.totalorder %s96, %s98
      %p105 = scmp.eq.s32.totalorder %s25, 7
      %p106 = por %p104, %p105
      %p107 = scmp.ne.s32.totalorder %s98, %s99
      %p108 = scmp.eq.s32.totalorder %s25, 0
      %p109 = por %p107, %p108
      %p110 = scmp.ne.s32.totalorder %s98, %s99
      %p111 = scmp.eq.s32.totalorder %s26, 7
      %p112 = por %p110, %p111
      %p114 = scmp.ne.s32.totalorder %s99, %s113
      %p115 = scmp.eq.s32.totalorder %s26, 0
      %p116 = por %p114, %p115
      %s118 = sadd.s32 %s117, 1
      %p121 = scmp.eq.s32.totalorder %s20, 7
      %p122 = scmp.ne.s32.totalorder %s117, %s119
      %p123 = scmp.eq.s32.totalorder %s20, 0
      %p124 = por %p122, %p123
      %p125 = scmp.ne.s32.totalorder %s117, %s119
      %p126 = scmp.eq.s32.totalorder %s25, 7
      %p127 = por %p125, %p126
      %p128 = scmp.ne.s32.totalorder %s119, %s120
      %p129 = scmp.eq.s32.totalorder %s25, 0
      %p130 = por %p128, %p129
      %p131 = scmp.ne.s32.totalorder %s119, %s120
      %p132 = scmp.eq.s32.totalorder %s26, 7
      %p133 = por %p131, %p132
      %p135 = scmp.ne.s32.totalorder %s120, %s134
      %p136 = scmp.eq.s32.totalorder %s26, 0
      %p137 = por %p135, %p136
      %s138 = ssub.s32 %s20, %s27
      %p139 = scmp.eq.s32.totalorder %s138, 0
      %s141 = sadd.s32 %s140, 1
      %s142 = scalar_select %p139, %s140, %s141
      %p145 = pneg %p139
      %p146 = scmp.eq.s32.totalorder %s20, 7
      %p147 = por %p145, %p146
      %p148 = scmp.ne.s32.totalorder %s140, %s143
      %p149 = scmp.eq.s32.totalorder %s20, 0
      %p150 = por %p148, %p149
      %p151 = scmp.ne.s32.totalorder %s140, %s143
      %p152 = scmp.eq.s32.totalorder %s25, 7
      %p153 = por %p151, %p152
      %p154 = scmp.ne.s32.totalorder %s143, %s144
      %p155 = scmp.eq.s32.totalorder %s25, 0
      %p156 = por %p154, %p155
      %p157 = scmp.ne.s32.totalorder %s143, %s144
      %p158 = scmp.eq.s32.totalorder %s26, 7
      %p159 = por %p157, %p158
      %p161 = scmp.ne.s32.totalorder %s144, %s160
      %p162 = scmp.eq.s32.totalorder %s26, 0
      %p163 = por %p161, %p162
      %s164 = ssub.s32 %s20, %s27
      %p165 = scmp.eq.s32.totalorder %s164, 0
      %s167 = sadd.s32 %s166, 1
      %s168 = scalar_select %p165, %s166, %s167
      %p171 = pneg %p165
      %p172 = scmp.eq.s32.totalorder %s20, 7
      %p173 = por %p171, %p172
      %p174 = scmp.ne.s32.totalorder %s166, %s169
      %p175 = scmp.eq.s32.totalorder %s20, 0
      %p176 = por %p174, %p175
      %p177 = scmp.ne.s32.totalorder %s166, %s169
      %p178 = scmp.eq.s32.totalorder %s25, 7
      %p179 = por %p177, %p178
      %p180 = scmp.ne.s32.totalorder %s169, %s170
      %p181 = scmp.eq.s32.totalorder %s25, 0
      %p182 = por %p180, %p181
      %p183 = scmp.ne.s32.totalorder %s169, %s170
      %p184 = scmp.eq.s32.totalorder %s26, 7
      %p185 = por %p183, %p184
      %p187 = scmp.ne.s32.totalorder %s170, %s186
      %p188 = scmp.eq.s32.totalorder %s26, 0
      %p189 = por %p187, %p188
      %s191 = sadd.s32 %s190, 1
      %p194 = scmp.eq.s32.totalorder %s20, 7
      %p195 = scmp.ne.s32.totalorder %s190, %s192
      %p196 = scmp.eq.s32.totalorder %s20, 0
      %p197 = por %p195, %p196
      %p198 = scmp.ne.s32.totalorder %s190, %s192
      %p199 = scmp.eq.s32.totalorder %s25, 7
      %p200 = por %p198, %p199
      %p201 = scmp.ne.s32.totalorder %s192, %s193
      %p202 = scmp.eq.s32.totalorder %s25, 0
      %p203 = por %p201, %p202
      %p204 = scmp.ne.s32.totalorder %s192, %s193
      %p205 = scmp.eq.s32.totalorder %s26, 7
      %p206 = por %p204, %p205
      %p208 = scmp.ne.s32.totalorder %s193, %s207
      %p209 = scmp.eq.s32.totalorder %s26, 0
      %p210 = por %p208, %p209
      %p211 = scmp.le.s32.totalorder 1, %s20
      %p212 = scmp.lt.s32.totalorder %s20, 9
      %p213 = pnand %p211, %p212
      %p214 = pneg %p213
      // Predicated region
      $region9: #{tpu_custom_call.1} parent=5 // pred_check
        _
      $region10: #{tpu_custom_call.1} parent=5 // pred_check_branch
        %216 = sbr.rel (%p213) target = $region12
      $region11: #{tpu_custom_call.1} parent=5 // pred_region
        %s217 = ssub.s32 %s20, 1
        // Predicated region
        $region13: #{tpu_custom_call.1} parent=11 // pred_check
          %p218 = pneg %p67
        $region14: #{tpu_custom_call.1} parent=11 // pred_check_branch
          %220 = sbr.rel (%p218) target = $region16
        $region15: #{tpu_custom_call.1} parent=11 // pred_region
          %s222 = ssub.s32 64, 64
          %223 = vsyncadd [#allocation6], %s222
          %s224 = sshll.u32 [#allocation5], 4
          %s225 = int_to_ptr.vmem [resolvable:$true] %s224
          %230 = dma.hbm_to_vmem [thread:$0]  %s1, 64, %s225, [#allocation6], 32, 32, 2
        $region16: #{tpu_custom_call.1} parent=11 // pred_fallthru
          _
        // Predicated region
        $region17: #{tpu_custom_call.1} parent=11 // pred_check
          %p231 = pneg %p88
        $region18: #{tpu_custom_call.1} parent=11 // pred_check_branch
          %233 = sbr.rel (%p231) target = $region20
        $region19: #{tpu_custom_call.1} parent=11 // pred_region
          %s235 = ssub.s32 8192, 8192
          %236 = vsyncadd [#allocation6], %s235
          %s237 = sshll.u32 [#allocation7], 4
          %s238 = int_to_ptr.vmem [resolvable:$true] %s237
          %243 = dma.hbm_to_vmem [thread:$0]  %s2, 8192, %s238, [#allocation6], 64, 64, 4
        $region20: #{tpu_custom_call.1} parent=11 // pred_fallthru
          _
        // Predicated region
        $region21: #{tpu_custom_call.1} parent=11 // pred_check
          %p244 = pneg %p109
        $region22: #{tpu_custom_call.1} parent=11 // pred_check_branch
          %246 = sbr.rel (%p244) target = $region24
        $region23: #{tpu_custom_call.1} parent=11 // pred_region
          %s248 = ssub.s32 256, 256
          %249 = vsyncadd [#allocation9], %s248
          %s250 = sshll.u32 [#allocation8], 4
          %s251 = int_to_ptr.vmem [resolvable:$true] %s250
          %256 = dma.hbm_to_vmem [thread:$0]  %s3, 256, %s251, [#allocation9], 64, 64, 4
        $region24: #{tpu_custom_call.1} parent=11 // pred_fallthru
          _
        // Predicated region
        $region25: #{tpu_custom_call.1} parent=11 // pred_check
          %p257 = pneg %p130
        $region26: #{tpu_custom_call.1} parent=11 // pred_check_branch
          %259 = sbr.rel (%p257) target = $region28
        $region27: #{tpu_custom_call.1} parent=11 // pred_region
          _
        $region28: #{tpu_custom_call.1} parent=11 // pred_fallthru
          _
      $region12: #{tpu_custom_call.1} parent=5 // pred_fallthru
        _
      %p260 = scmp.lt.s32.totalorder %s20, 8
      // Predicated region
      $region29: #{tpu_custom_call.1} parent=5 // pred_check
        %p261 = pneg %p260
      $region30: #{tpu_custom_call.1} parent=5 // pred_check_branch
        %263 = sbr.rel (%p261) target = $region32
      $region31: #{tpu_custom_call.1} parent=5 // pred_region
        // Predicated region
        $region33: #{tpu_custom_call.1} parent=31 // pred_check
          %p264 = pneg %p40
        $region34: #{tpu_custom_call.1} parent=31 // pred_check_branch
          %266 = sbr.rel (%p264) target = $region36
        $region35: #{tpu_custom_call.1} parent=31 // pred_region
          %s267 = sand.u32 %s30, 1
          %s268 = scalar_lea.sflag [#allocation3], %s267
          %s269 = sand.u32 %s30, 1
          %s270 = smul.addr %s269, 16
          %s271 = scalar_lea.vmem [#allocation2], %s270
          %s273 = ssub.s32 256, 256
          %274 = vsyncadd %s268, %s273
          %s275 = smul.addr %s20, 8
          %s276 = smul.addr %s275, 32
          %s277 = scalar_lea.hbm %s0, %s276
          %s279 = sshll.u32 %s271, 4
          %s280 = int_to_ptr.vmem [resolvable:$true] %s279
          %282 = dma.hbm_to_vmem [thread:$0]  %s277, 256, %s280, %s268
        $region36: #{tpu_custom_call.1} parent=31 // pred_fallthru
          _
      $region32: #{tpu_custom_call.1} parent=5 // pred_fallthru
        _
      %p283 = scmp.le.s32.totalorder 1, %s20
      %p284 = scmp.lt.s32.totalorder %s20, 9
      %p285 = pnand %p283, %p284
      %p286 = pneg %p285
      // Predicated region
      $region37: #{tpu_custom_call.1} parent=5 // pred_check
        _
      $region38: #{tpu_custom_call.1} parent=5 // pred_check_branch
        %288 = sbr.rel (%p285) target = $region40
      $region39: #{tpu_custom_call.1} parent=5 // pred_region
        %s289 = ssub.s32 %s20, 1
        %s290 = sand.u32 %s33, 1
        %s291 = scalar_lea.sflag [#allocation3], %s290
        %s292 = sand.u32 %s33, 1
        %s293 = smul.addr %s292, 16
        %s294 = scalar_lea.vmem [#allocation2], %s293
        // Predicated region
        $region41: #{tpu_custom_call.1} parent=39 // pred_check
          %p295 = pneg %p46
        $region42: #{tpu_custom_call.1} parent=39 // pred_check_branch
          %297 = sbr.rel (%p295) target = $region44
        $region43: #{tpu_custom_call.1} parent=39 // pred_region
          %298 = dma.done %s291, 256
        $region44: #{tpu_custom_call.1} parent=39 // pred_fallthru
          _
        // Predicated region
        $region45: #{tpu_custom_call.1} parent=39 // pred_check
          %p299 = pneg %p67
        $region46: #{tpu_custom_call.1} parent=39 // pred_check_branch
          %301 = sbr.rel (%p299) target = $region48
        $region47: #{tpu_custom_call.1} parent=39 // pred_region
          %302 = dma.done [#allocation6], 64
        $region48: #{tpu_custom_call.1} parent=39 // pred_fallthru
          _
        // Predicated region
        $region49: #{tpu_custom_call.1} parent=39 // pred_check
          %p303 = pneg %p88
        $region50: #{tpu_custom_call.1} parent=39 // pred_check_branch
          %305 = sbr.rel (%p303) target = $region52
        $region51: #{tpu_custom_call.1} parent=39 // pred_region
          %306 = dma.done [#allocation6], 8192
        $region52: #{tpu_custom_call.1} parent=39 // pred_fallthru
          _
        // Predicated region
        $region53: #{tpu_custom_call.1} parent=39 // pred_check
          %p307 = pneg %p109
        $region54: #{tpu_custom_call.1} parent=39 // pred_check_branch
          %309 = sbr.rel (%p307) target = $region56
        $region55: #{tpu_custom_call.1} parent=39 // pred_region
          %310 = dma.done [#allocation9], 256
        $region56: #{tpu_custom_call.1} parent=39 // pred_fallthru
          _
        %s311 = sand.u32 %s33, 1
        %s312 = scalar_lea.sflag [#allocation3], %s311
        %s313 = sand.u32 %s33, 1
        %s314 = smul.addr %s313, 16
        %s315 = scalar_lea.vmem [#allocation2], %s314
        %p316 = pneg %p46
        %p317 = pneg %p43
        %p318 = pneg %p67
        %p319 = pneg %p64
        %p320 = pneg %p88
        %p321 = pneg %p85
        %p322 = pneg %p109
        %p323 = pneg %p106
        %p324 = pneg %p130
        %p325 = pneg %p127
        %p326 = pneg %p156
        %p327 = pneg %p153
        %p328 = scmp.lt.s32.totalorder %s25, 7
        %s329 = scalar_select %p328, %s25, 7
        %s330 = smul.addr %s329, 2
        %s331 = scalar_lea.vmem %s5, %s330
        %p332 = pneg %p182
        %p333 = pneg %p179
        %p334 = scmp.lt.s32.totalorder %s25, 7
        %s335 = scalar_select %p334, %s25, 7
        %s336 = smul.addr %s335, 2
        %s337 = scalar_lea.vmem %s6, %s336
        %p338 = pneg %p203
        %p339 = pneg %p200
        %p340 = scmp.lt.s32.totalorder %s25, 7
        %s341 = scalar_select %p340, %s25, 7
        %s342 = smul.addr %s341, 2
        %s343 = scalar_lea.vmem %s5, %s342
        %p344 = scmp.lt.s32.totalorder %s25, 7
        %s345 = scalar_select %p344, %s25, 7
        %s346 = smul.addr %s345, 2
        %s347 = scalar_lea.vmem %s6, %s346
        %p349 = scmp.eq.s32.totalorder %s25, 0
        // Predicated region
        $region57: #{tpu_custom_call.1} parent=39 // pred_check
          %p350 = pneg %p349
        $region58: #{tpu_custom_call.1} parent=39 // pred_check_branch
          %352 = sbr.rel (%p350) target = $region60
        $region59: #{tpu_custom_call.1} parent=39 // pred_region
          %v353 = vld [vmem:[#allocation5] sm:$0x3]
          %v354 = vld [vmem:[#allocation5 + $0x2] sm:$0x3]
          %vm355 = vcmask 254976
          %356 = vst.msk [vmem:[#allocation10] sm:$0x3] %vm355, %v353
          %357 = vst.msk [vmem:[#allocation10 + $0x2] sm:$0x3] %vm355, %v354
        $region60: #{tpu_custom_call.1} parent=39 // pred_fallthru
          _
        %v358 = vld [vmem:[#allocation10] sm:$0x3]
        %s359 = scalar_lea.vmem [#allocation10], 2
        %v360 = vld [vmem:[%s359] sm:$0x3]
        %v361 = vld [vmem:[%s294] sm:$0xff]
        %v362 = vld [vmem:[%s294 + $0x8] sm:$0xff]
        %v363 = vld [vmem:[%s4] sm:$0x1]
        %v364 = vld [vmem:[%s4 + $0x1] sm:$0x1]
        %v365 = vld [vmem:[%s4 + $0x2] sm:$0x1]
        %v368 = vcombine.high %v361, %v361
        %v370 = vunpack.c.l.s4 1983009808
        %v371 = vunpack.c.0.s8 %v370
        %v372 = vlaneseq
        %v373 = vshrl.u32 %v372, 7
        %v374 = vsub.s32 %v371, %v373
        %v375 = vrot.slane %v361, %v374
        %v377 = vunpack.c.l.s4 1983009808
        %v378 = vunpack.c.0.s8 %v377
        %v379 = vlaneseq
        %v380 = vshrl.u32 %v379, 7
        %v381 = vsub.s32 %v378, %v380
        %v382 = vrot.slane %v368, %v381
        %v383 = vcombine.high %v375, %v375
        %v384 = vcombine.high %v382, %v382
        %v385 = vcombine.high %v362, %v362
        %v387 = vunpack.c.l.s4 1983009808
        %v388 = vunpack.c.0.s8 %v387
        %v389 = vlaneseq
        %v390 = vshrl.u32 %v389, 7
        %v391 = vsub.s32 %v388, %v390
        %v392 = vrot.slane %v362, %v391
        %v394 = vunpack.c.l.s4 1983009808
        %v395 = vunpack.c.0.s8 %v394
        %v396 = vlaneseq
        %v397 = vshrl.u32 %v396, 7
        %v398 = vsub.s32 %v395, %v397
        %v399 = vrot.slane %v385, %v398
        %v400 = vcombine.high %v392, %v392
        %v401 = vcombine.high %v399, %v399
        %v410 = vpack.c.bf16 %v375, %v375
        %v411 = vpack.c.bf16 %v383, %v383
        %v412 = vpack.c.bf16 %v382, %v382
        %v413 = vpack.c.bf16 %v384, %v384
        %v414 = vpack.c.bf16 %v392, %v392
        %v415 = vpack.c.bf16 %v400, %v400
        %v416 = vpack.c.bf16 %v399, %v399
        %v417 = vpack.c.bf16 %v401, %v401
        %v418 = vld [vmem:[#allocation7] sm:$0xf]
        %v419 = vld [vmem:[#allocation7 + $0x4] sm:$0xf]
        %v420 = vld [vmem:[#allocation7 + $0x8] sm:$0xf]
        %v421 = vld [vmem:[#allocation7 + $0xc] sm:$0xf]
        %v422 = vld [vmem:[#allocation7 + $0x10] sm:$0xf]
        %v423 = vld [vmem:[#allocation7 + $0x14] sm:$0xf]
        %v424 = vld [vmem:[#allocation7 + $0x18] sm:$0xf]
        %v425 = vld [vmem:[#allocation7 + $0x1c] sm:$0xf]
        %v426 = vld [vmem:[#allocation7 + $0x20] sm:$0xf]
        %v427 = vld [vmem:[#allocation7 + $0x24] sm:$0xf]
        %v428 = vld [vmem:[#allocation7 + $0x28] sm:$0xf]
        %v429 = vld [vmem:[#allocation7 + $0x2c] sm:$0xf]
        %v430 = vld [vmem:[#allocation7 + $0x30] sm:$0xf]
        %v431 = vld [vmem:[#allocation7 + $0x34] sm:$0xf]
        %v432 = vld [vmem:[#allocation7 + $0x38] sm:$0xf]
        %v433 = vld [vmem:[#allocation7 + $0x3c] sm:$0xf]
        %v434 = vld [vmem:[#allocation7 + $0x40] sm:$0xf]
        %v435 = vld [vmem:[#allocation7 + $0x44] sm:$0xf]
        %v436 = vld [vmem:[#allocation7 + $0x48] sm:$0xf]
        %v437 = vld [vmem:[#allocation7 + $0x4c] sm:$0xf]
        %v438 = vld [vmem:[#allocation7 + $0x50] sm:$0xf]
        %v439 = vld [vmem:[#allocation7 + $0x54] sm:$0xf]
        %v440 = vld [vmem:[#allocation7 + $0x58] sm:$0xf]
        %v441 = vld [vmem:[#allocation7 + $0x5c] sm:$0xf]
        %v442 = vld [vmem:[#allocation7 + $0x60] sm:$0xf]
        %v443 = vld [vmem:[#allocation7 + $0x64] sm:$0xf]
        %v444 = vld [vmem:[#allocation7 + $0x68] sm:$0xf]
        %v445 = vld [vmem:[#allocation7 + $0x6c] sm:$0xf]
        %v446 = vld [vmem:[#allocation7 + $0x70] sm:$0xf]
        %v447 = vld [vmem:[#allocation7 + $0x74] sm:$0xf]
        %v448 = vld [vmem:[#allocation7 + $0x78] sm:$0xf]
        %v449 = vld [vmem:[#allocation7 + $0x7c] sm:$0xf]
        %v450 = vld [vmem:[#allocation7 + $0x80] sm:$0xf]
        %v451 = vld [vmem:[#allocation7 + $0x84] sm:$0xf]
        %v452 = vld [vmem:[#allocation7 + $0x88] sm:$0xf]
        %v453 = vld [vmem:[#allocation7 + $0x8c] sm:$0xf]
        %v454 = vld [vmem:[#allocation7 + $0x90] sm:$0xf]
        %v455 = vld [vmem:[#allocation7 + $0x94] sm:$0xf]
        %v456 = vld [vmem:[#allocation7 + $0x98] sm:$0xf]
        %v457 = vld [vmem:[#allocation7 + $0x9c] sm:$0xf]
        %v458 = vld [vmem:[#allocation7 + $0xa0] sm:$0xf]
        %v459 = vld [vmem:[#allocation7 + $0xa4] sm:$0xf]
        %v460 = vld [vmem:[#allocation7 + $0xa8] sm:$0xf]
        %v461 = vld [vmem:[#allocation7 + $0xac] sm:$0xf]
        %v462 = vld [vmem:[#allocation7 + $0xb0] sm:$0xf]
        %v463 = vld [vmem:[#allocation7 + $0xb4] sm:$0xf]
        %v464 = vld [vmem:[#allocation7 + $0xb8] sm:$0xf]
        %v465 = vld [vmem:[#allocation7 + $0xbc] sm:$0xf]
        %v466 = vld [vmem:[#allocation7 + $0xc0] sm:$0xf]
        %v467 = vld [vmem:[#allocation7 + $0xc4] sm:$0xf]
        %v468 = vld [vmem:[#allocation7 + $0xc8] sm:$0xf]
        %v469 = vld [vmem:[#allocation7 + $0xcc] sm:$0xf]
        %v470 = vld [vmem:[#allocation7 + $0xd0] sm:$0xf]
        %v471 = vld [vmem:[#allocation7 + $0xd4] sm:$0xf]
        %v472 = vld [vmem:[#allocation7 + $0xd8] sm:$0xf]
        %v473 = vld [vmem:[#allocation7 + $0xdc] sm:$0xf]
        %v474 = vld [vmem:[#allocation7 + $0xe0] sm:$0xf]
        %v475 = vld [vmem:[#allocation7 + $0xe4] sm:$0xf]
        %v476 = vld [vmem:[#allocation7 + $0xe8] sm:$0xf]
        %v477 = vld [vmem:[#allocation7 + $0xec] sm:$0xf]
        %v478 = vld [vmem:[#allocation7 + $0xf0] sm:$0xf]
        %v479 = vld [vmem:[#allocation7 + $0xf4] sm:$0xf]
        %v480 = vld [vmem:[#allocation7 + $0xf8] sm:$0xf]
        %v481 = vld [vmem:[#allocation7 + $0xfc] sm:$0xf]
        %v482 = vld [vmem:[#allocation7 + $0x100] sm:$0xf]
        %v483 = vld [vmem:[#allocation7 + $0x104] sm:$0xf]
        %v484 = vld [vmem:[#allocation7 + $0x108] sm:$0xf]
        %v485 = vld [vmem:[#allocation7 + $0x10c] sm:$0xf]
        %v486 = vld [vmem:[#allocation7 + $0x110] sm:$0xf]
        %v487 = vld [vmem:[#allocation7 + $0x114] sm:$0xf]
        %v488 = vld [vmem:[#allocation7 + $0x118] sm:$0xf]
        %v489 = vld [vmem:[#allocation7 + $0x11c] sm:$0xf]
        %v490 = vld [vmem:[#allocation7 + $0x120] sm:$0xf]
        %v491 = vld [vmem:[#allocation7 + $0x124] sm:$0xf]
        %v492 = vld [vmem:[#allocation7 + $0x128] sm:$0xf]
        %v493 = vld [vmem:[#allocation7 + $0x12c] sm:$0xf]
        %v494 = vld [vmem:[#allocation7 + $0x130] sm:$0xf]
        %v495 = vld [vmem:[#allocation7 + $0x134] sm:$0xf]
        %v496 = vld [vmem:[#allocation7 + $0x138] sm:$0xf]
        %v497 = vld [vmem:[#allocation7 + $0x13c] sm:$0xf]
        %v498 = vld [vmem:[#allocation7 + $0x140] sm:$0xf]
        %v499 = vld [vmem:[#allocation7 + $0x144] sm:$0xf]
        %v500 = vld [vmem:[#allocation7 + $0x148] sm:$0xf]
        %v501 = vld [vmem:[#allocation7 + $0x14c] sm:$0xf]
        %v502 = vld [vmem:[#allocation7 + $0x150] sm:$0xf]
        %v503 = vld [vmem:[#allocation7 + $0x154] sm:$0xf]
        %v504 = vld [vmem:[#allocation7 + $0x158] sm:$0xf]
        %v505 = vld [vmem:[#allocation7 + $0x15c] sm:$0xf]
        %v506 = vld [vmem:[#allocation7 + $0x160] sm:$0xf]
        %v507 = vld [vmem:[#allocation7 + $0x164] sm:$0xf]
        %v508 = vld [vmem:[#allocation7 + $0x168] sm:$0xf]
        %v509 = vld [vmem:[#allocation7 + $0x16c] sm:$0xf]
        %v510 = vld [vmem:[#allocation7 + $0x170] sm:$0xf]
        %v511 = vld [vmem:[#allocation7 + $0x174] sm:$0xf]
        %v512 = vld [vmem:[#allocation7 + $0x178] sm:$0xf]
        %v513 = vld [vmem:[#allocation7 + $0x17c] sm:$0xf]
        %v514 = vld [vmem:[#allocation7 + $0x180] sm:$0xf]
        %v515 = vld [vmem:[#allocation7 + $0x184] sm:$0xf]
        %v516 = vld [vmem:[#allocation7 + $0x188] sm:$0xf]
        %v517 = vld [vmem:[#allocation7 + $0x18c] sm:$0xf]
        %v518 = vld [vmem:[#allocation7 + $0x190] sm:$0xf]
        %v519 = vld [vmem:[#allocation7 + $0x194] sm:$0xf]
        %v520 = vld [vmem:[#allocation7 + $0x198] sm:$0xf]
        %v521 = vld [vmem:[#allocation7 + $0x19c] sm:$0xf]
        %v522 = vld [vmem:[#allocation7 + $0x1a0] sm:$0xf]
        %v523 = vld [vmem:[#allocation7 + $0x1a4] sm:$0xf]
        %v524 = vld [vmem:[#allocation7 + $0x1a8] sm:$0xf]
        %v525 = vld [vmem:[#allocation7 + $0x1ac] sm:$0xf]
        %v526 = vld [vmem:[#allocation7 + $0x1b0] sm:$0xf]
        %v527 = vld [vmem:[#allocation7 + $0x1b4] sm:$0xf]
        %v528 = vld [vmem:[#allocation7 + $0x1b8] sm:$0xf]
        %v529 = vld [vmem:[#allocation7 + $0x1bc] sm:$0xf]
        %v530 = vld [vmem:[#allocation7 + $0x1c0] sm:$0xf]
        %v531 = vld [vmem:[#allocation7 + $0x1c4] sm:$0xf]
        %v532 = vld [vmem:[#allocation7 + $0x1c8] sm:$0xf]
        %v533 = vld [vmem:[#allocation7 + $0x1cc] sm:$0xf]
        %v534 = vld [vmem:[#allocation7 + $0x1d0] sm:$0xf]
        %v535 = vld [vmem:[#allocation7 + $0x1d4] sm:$0xf]
        %v536 = vld [vmem:[#allocation7 + $0x1d8] sm:$0xf]
        %v537 = vld [vmem:[#allocation7 + $0x1dc] sm:$0xf]
        %v538 = vld [vmem:[#allocation7 + $0x1e0] sm:$0xf]
        %v539 = vld [vmem:[#allocation7 + $0x1e4] sm:$0xf]
        %v540 = vld [vmem:[#allocation7 + $0x1e8] sm:$0xf]
        %v541 = vld [vmem:[#allocation7 + $0x1ec] sm:$0xf]
        %v542 = vld [vmem:[#allocation7 + $0x1f0] sm:$0xf]
        %v543 = vld [vmem:[#allocation7 + $0x1f4] sm:$0xf]
        %v544 = vld [vmem:[#allocation7 + $0x1f8] sm:$0xf]
        %v545 = vld [vmem:[#allocation7 + $0x1fc] sm:$0xf]
        %v546 = vpack.c.bf16 %v358, %v358
        %v547 = vld [vmem:[#allocation8] sm:$0xf]
        %v548 = vld [vmem:[#allocation8 + $0x4] sm:$0xf]
        %v549 = vld [vmem:[#allocation8 + $0x8] sm:$0xf]
        %v550 = vld [vmem:[#allocation8 + $0xc] sm:$0xf]
        %v555 = vunpack.c.l.b16 %v547
        %v556 = vunpack.c.l.b16 %v548
        %v557 = vunpack.c.l.b16 %v549
        %v558 = vunpack.c.l.b16 %v550
        %v559 = vpack.c.b16 %v556, %v555
        %v560 = vpack.c.b16 %v558, %v557
        %vm563 = vcmask 261120
        %v565 = vsel %vm563, %v546, 0
        %567 = vmatprep.subr.bf16.mxu0 0
        %568 = vmatpush1.bf16.msra.mxu0 %v559
        %569 = vmatprep.subr.bf16.mxu0 0
        %570 = vmatpush1.bf16.msra.mxu0 %v560
        %571 = vmatprep.subr.bf16.mxu0 0
        %572 = vmatpush1.bf16.msra.mxu0 0
        %573 = vmatprep.subr.bf16.mxu0 0
        %574 = vmatpush1.bf16.msra.mxu0 0
        %575 = vmatprep.subr.bf16.mxu0 0
        %576 = vmatpush1.bf16.msra.mxu0 0
        %577 = vmatprep.subr.bf16.mxu0 0
        %578 = vmatpush1.bf16.msra.mxu0 0
        %579 = vmatprep.subr.bf16.mxu0 0
        %580 = vmatpush1.bf16.msra.mxu0 0
        %581 = vmatprep.subr.bf16.mxu0 0
        %582 = vmatpush1.bf16.msra.mxu0 0
        %583 = vmatprep.subr.bf16.mxu0 0
        %584 = vmatpush1.bf16.msra.mxu0 0
        %585 = vmatprep.subr.bf16.mxu0 0
        %586 = vmatpush1.bf16.msra.mxu0 0
        %587 = vmatprep.subr.bf16.mxu0 0
        %588 = vmatpush1.bf16.msra.mxu0 0
        %589 = vmatprep.subr.bf16.mxu0 0
        %590 = vmatpush1.bf16.msra.mxu0 0
        %591 = vmatprep.subr.bf16.mxu0 0
        %592 = vmatpush1.bf16.msra.mxu0 0
        %593 = vmatprep.subr.bf16.mxu0 0
        %594 = vmatpush1.bf16.msra.mxu0 0
        %595 = vmatprep.subr.bf16.mxu0 0
        %596 = vmatpush1.bf16.msra.mxu0 0
        %597 = vmatprep.subr.bf16.mxu0 0
        %598 = vmatpush1.bf16.msra.mxu0 0
        %599 = vmatprep.mubr.bf16.mxu0 0
        %600 = vmatmul.mubr.bf16.gmra.mrb[0].mxu0 %v565
        %v601 = vpop.f32.mrb[0].mxu0
        %v602 = vadd.f32 0.0, %v601
        %v603 = vpop.f32.mrb[0].mxu0
        %v604 = vpop.f32.mrb[0].mxu0
        %v605 = vpop.f32.mrb[0].mxu0
        %606 = vdwg.mxu0
        %v735 = vunpack.c.l.b16 %v418
        %v736 = vunpack.c.l.b16 %v419
        %v737 = vunpack.c.l.b16 %v420
        %v738 = vunpack.c.l.b16 %v421
        %v739 = vunpack.c.l.b16 %v422
        %v740 = vunpack.c.l.b16 %v423
        %v741 = vunpack.c.l.b16 %v424
        %v742 = vunpack.c.l.b16 %v425
        %v743 = vunpack.c.l.b16 %v426
        %v744 = vunpack.c.l.b16 %v427
        %v745 = vunpack.c.l.b16 %v428
        %v746 = vunpack.c.l.b16 %v429
        %v747 = vunpack.c.l.b16 %v430
        %v748 = vunpack.c.l.b16 %v431
        %v749 = vunpack.c.l.b16 %v432
        %v750 = vunpack.c.l.b16 %v433
        %v751 = vunpack.c.l.b16 %v434
        %v752 = vunpack.c.l.b16 %v435
        %v753 = vunpack.c.l.b16 %v436
        %v754 = vunpack.c.l.b16 %v437
        %v755 = vunpack.c.l.b16 %v438
        %v756 = vunpack.c.l.b16 %v439
        %v757 = vunpack.c.l.b16 %v440
        %v758 = vunpack.c.l.b16 %v441
        %v759 = vunpack.c.l.b16 %v442
        %v760 = vunpack.c.l.b16 %v443
        %v761 = vunpack.c.l.b16 %v444
        %v762 = vunpack.c.l.b16 %v445
        %v763 = vunpack.c.l.b16 %v446
        %v764 = vunpack.c.l.b16 %v447
        %v765 = vunpack.c.l.b16 %v448
        %v766 = vunpack.c.l.b16 %v449
        %v767 = vunpack.c.l.b16 %v450
        %v768 = vunpack.c.l.b16 %v451
        %v769 = vunpack.c.l.b16 %v452
        %v770 = vunpack.c.l.b16 %v453
        %v771 = vunpack.c.l.b16 %v454
        %v772 = vunpack.c.l.b16 %v455
        %v773 = vunpack.c.l.b16 %v456
        %v774 = vunpack.c.l.b16 %v457
        %v775 = vunpack.c.l.b16 %v458
        %v776 = vunpack.c.l.b16 %v459
        %v777 = vunpack.c.l.b16 %v460
        %v778 = vunpack.c.l.b16 %v461
        %v779 = vunpack.c.l.b16 %v462
        %v780 = vunpack.c.l.b16 %v463
        %v781 = vunpack.c.l.b16 %v464
        %v782 = vunpack.c.l.b16 %v465
        %v783 = vunpack.c.l.b16 %v466
        %v784 = vunpack.c.l.b16 %v467
        %v785 = vunpack.c.l.b16 %v468
        %v786 = vunpack.c.l.b16 %v469
        %v787 = vunpack.c.l.b16 %v470
        %v788 = vunpack.c.l.b16 %v471
        %v789 = vunpack.c.l.b16 %v472
        %v790 = vunpack.c.l.b16 %v473
        %v791 = vunpack.c.l.b16 %v474
        %v792 = vunpack.c.l.b16 %v475
        %v793 = vunpack.c.l.b16 %v476
        %v794 = vunpack.c.l.b16 %v477
        %v795 = vunpack.c.l.b16 %v478
        %v796 = vunpack.c.l.b16 %v479
        %v797 = vunpack.c.l.b16 %v480
        %v798 = vunpack.c.l.b16 %v481
        %v799 = vunpack.c.l.b16 %v482
        %v800 = vunpack.c.l.b16 %v483
        %v801 = vunpack.c.l.b16 %v484
        %v802 = vunpack.c.l.b16 %v485
        %v803 = vunpack.c.l.b16 %v486
        %v804 = vunpack.c.l.b16 %v487
        %v805 = vunpack.c.l.b16 %v488
        %v806 = vunpack.c.l.b16 %v489
        %v807 = vunpack.c.l.b16 %v490
        %v808 = vunpack.c.l.b16 %v491
        %v809 = vunpack.c.l.b16 %v492
        %v810 = vunpack.c.l.b16 %v493
        %v811 = vunpack.c.l.b16 %v494
        %v812 = vunpack.c.l.b16 %v495
        %v813 = vunpack.c.l.b16 %v496
        %v814 = vunpack.c.l.b16 %v497
        %v815 = vunpack.c.l.b16 %v498
        %v816 = vunpack.c.l.b16 %v499
        %v817 = vunpack.c.l.b16 %v500
        %v818 = vunpack.c.l.b16 %v501
        %v819 = vunpack.c.l.b16 %v502
        %v820 = vunpack.c.l.b16 %v503
        %v821 = vunpack.c.l.b16 %v504
        %v822 = vunpack.c.l.b16 %v505
        %v823 = vunpack.c.l.b16 %v506
        %v824 = vunpack.c.l.b16 %v507
        %v825 = vunpack.c.l.b16 %v508
        %v826 = vunpack.c.l.b16 %v509
        %v827 = vunpack.c.l.b16 %v510
        %v828 = vunpack.c.l.b16 %v511
        %v829 = vunpack.c.l.b16 %v512
        %v830 = vunpack.c.l.b16 %v513
        %v831 = vunpack.c.l.b16 %v514
        %v832 = vunpack.c.l.b16 %v515
        %v833 = vunpack.c.l.b16 %v516
        %v834 = vunpack.c.l.b16 %v517
        %v835 = vunpack.c.l.b16 %v518
        %v836 = vunpack.c.l.b16 %v519
        %v837 = vunpack.c.l.b16 %v520
        %v838 = vunpack.c.l.b16 %v521
        %v839 = vunpack.c.l.b16 %v522
        %v840 = vunpack.c.l.b16 %v523
        %v841 = vunpack.c.l.b16 %v524
        %v842 = vunpack.c.l.b16 %v525
        %v843 = vunpack.c.l.b16 %v526
        %v844 = vunpack.c.l.b16 %v527
        %v845 = vunpack.c.l.b16 %v528
        %v846 = vunpack.c.l.b16 %v529
        %v847 = vunpack.c.l.b16 %v530
        %v848 = vunpack.c.l.b16 %v531
        %v849 = vunpack.c.l.b16 %v532
        %v850 = vunpack.c.l.b16 %v533
        %v851 = vunpack.c.l.b16 %v534
        %v852 = vunpack.c.l.b16 %v535
        %v853 = vunpack.c.l.b16 %v536
        %v854 = vunpack.c.l.b16 %v537
        %v855 = vunpack.c.l.b16 %v538
        %v856 = vunpack.c.l.b16 %v539
        %v857 = vunpack.c.l.b16 %v540
        %v858 = vunpack.c.l.b16 %v541
        %v859 = vunpack.c.l.b16 %v542
        %v860 = vunpack.c.l.b16 %v543
        %v861 = vunpack.c.l.b16 %v544
        %v862 = vunpack.c.l.b16 %v545
        %v863 = vpack.c.b16 %v736, %v735
        %v864 = vpack.c.b16 %v738, %v737
        %v865 = vpack.c.b16 %v740, %v739
        %v866 = vpack.c.b16 %v742, %v741
        %v867 = vpack.c.b16 %v744, %v743
        %v868 = vpack.c.b16 %v746, %v745
        %v869 = vpack.c.b16 %v748, %v747
        %v870 = vpack.c.b16 %v750, %v749
        %v871 = vpack.c.b16 %v752, %v751
        %v872 = vpack.c.b16 %v754, %v753
        %v873 = vpack.c.b16 %v756, %v755
        %v874 = vpack.c.b16 %v758, %v757
        %v875 = vpack.c.b16 %v760, %v759
        %v876 = vpack.c.b16 %v762, %v761
        %v877 = vpack.c.b16 %v764, %v763
        %v878 = vpack.c.b16 %v766, %v765
        %v879 = vpack.c.b16 %v768, %v767
        %v880 = vpack.c.b16 %v770, %v769
        %v881 = vpack.c.b16 %v772, %v771
        %v882 = vpack.c.b16 %v774, %v773
        %v883 = vpack.c.b16 %v776, %v775
        %v884 = vpack.c.b16 %v778, %v777
        %v885 = vpack.c.b16 %v780, %v779
        %v886 = vpack.c.b16 %v782, %v781
        %v887 = vpack.c.b16 %v784, %v783
        %v888 = vpack.c.b16 %v786, %v785
        %v889 = vpack.c.b16 %v788, %v787
        %v890 = vpack.c.b16 %v790, %v789
        %v891 = vpack.c.b16 %v792, %v791
        %v892 = vpack.c.b16 %v794, %v793
        %v893 = vpack.c.b16 %v796, %v795
        %v894 = vpack.c.b16 %v798, %v797
        %v895 = vpack.c.b16 %v800, %v799
        %v896 = vpack.c.b16 %v802, %v801
        %v897 = vpack.c.b16 %v804, %v803
        %v898 = vpack.c.b16 %v806, %v805
        %v899 = vpack.c.b16 %v808, %v807
        %v900 = vpack.c.b16 %v810, %v809
        %v901 = vpack.c.b16 %v812, %v811
        %v902 = vpack.c.b16 %v814, %v813
        %v903 = vpack.c.b16 %v816, %v815
        %v904 = vpack.c.b16 %v818, %v817
        %v905 = vpack.c.b16 %v820, %v819
        %v906 = vpack.c.b16 %v822, %v821
        %v907 = vpack.c.b16 %v824, %v823
        %v908 = vpack.c.b16 %v826, %v825
        %v909 = vpack.c.b16 %v828, %v827
        %v910 = vpack.c.b16 %v830, %v829
        %v911 = vpack.c.b16 %v832, %v831
        %v912 = vpack.c.b16 %v834, %v833
        %v913 = vpack.c.b16 %v836, %v835
        %v914 = vpack.c.b16 %v838, %v837
        %v915 = vpack.c.b16 %v840, %v839
        %v916 = vpack.c.b16 %v842, %v841
        %v917 = vpack.c.b16 %v844, %v843
        %v918 = vpack.c.b16 %v846, %v845
        %v919 = vpack.c.b16 %v848, %v847
        %v920 = vpack.c.b16 %v850, %v849
        %v921 = vpack.c.b16 %v852, %v851
        %v922 = vpack.c.b16 %v854, %v853
        %v923 = vpack.c.b16 %v856, %v855
        %v924 = vpack.c.b16 %v858, %v857
        %v925 = vpack.c.b16 %v860, %v859
        %v926 = vpack.c.b16 %v862, %v861
        %991 = vmatprep.subr.bf16.mxu0 0
        %992 = vmatpush1.bf16.msra.mxu0 %v863
        %993 = vmatprep.subr.bf16.mxu0 0
        %994 = vmatpush1.bf16.msra.mxu0 %v864
        %995 = vmatprep.subr.bf16.mxu0 0
        %996 = vmatpush1.bf16.msra.mxu0 %v865
        %997 = vmatprep.subr.bf16.mxu0 0
        %998 = vmatpush1.bf16.msra.mxu0 %v866
        %999 = vmatprep.subr.bf16.mxu0 0
        %1000 = vmatpush1.bf16.msra.mxu0 %v867
        %1001 = vmatprep.subr.bf16.mxu0 0
        %1002 = vmatpush1.bf16.msra.mxu0 %v868
        %1003 = vmatprep.subr.bf16.mxu0 0
        %1004 = vmatpush1.bf16.msra.mxu0 %v869
        %1005 = vmatprep.subr.bf16.mxu0 0
        %1006 = vmatpush1.bf16.msra.mxu0 %v870
        %1007 = vmatprep.subr.bf16.mxu0 0
        %1008 = vmatpush1.bf16.msra.mxu0 %v871
        %1009 = vmatprep.subr.bf16.mxu0 0
        %1010 = vmatpush1.bf16.msra.mxu0 %v872
        %1011 = vmatprep.subr.bf16.mxu0 0
        %1012 = vmatpush1.bf16.msra.mxu0 %v873
        %1013 = vmatprep.subr.bf16.mxu0 0
        %1014 = vmatpush1.bf16.msra.mxu0 %v874
        %1015 = vmatprep.subr.bf16.mxu0 0
        %1016 = vmatpush1.bf16.msra.mxu0 %v875
        %1017 = vmatprep.subr.bf16.mxu0 0
        %1018 = vmatpush1.bf16.msra.mxu0 %v876
        %1019 = vmatprep.subr.bf16.mxu0 0
        %1020 = vmatpush1.bf16.msra.mxu0 %v877
        %1021 = vmatprep.subr.bf16.mxu0 0
        %1022 = vmatpush1.bf16.msra.mxu0 %v878
        %1023 = vmatprep.mubr.bf16.mxu0 %v411
        %1024 = vmatmul.mubr.bf16.gmra.mrb[0].mxu0 %v410
        %v1025 = vpop.f32.mrb[0].mxu0
        %v1026 = vadd.f32 %v602, %v1025
        %v1027 = vpop.f32.mrb[0].mxu0
        %v1028 = vpop.f32.mrb[0].mxu0
        %v1029 = vpop.f32.mrb[0].mxu0
        %1030 = vdwg.mxu0
        %1031 = vmatprep.subr.bf16.mxu0 0
        %1032 = vmatpush1.bf16.msra.mxu0 %v879
        %1033 = vmatprep.subr.bf16.mxu0 0
        %1034 = vmatpush1.bf16.msra.mxu0 %v880
        %1035 = vmatprep.subr.bf16.mxu0 0
        %1036 = vmatpush1.bf16.msra.mxu0 %v881
        %1037 = vmatprep.subr.bf16.mxu0 0
        %1038 = vmatpush1.bf16.msra.mxu0 %v882
        %1039 = vmatprep.subr.bf16.mxu0 0
        %1040 = vmatpush1.bf16.msra.mxu0 %v883
        %1041 = vmatprep.subr.bf16.mxu0 0
        %1042 = vmatpush1.bf16.msra.mxu0 %v884
        %1043 = vmatprep.subr.bf16.mxu0 0
        %1044 = vmatpush1.bf16.msra.mxu0 %v885
        %1045 = vmatprep.subr.bf16.mxu0 0
        %1046 = vmatpush1.bf16.msra.mxu0 %v886
        %1047 = vmatprep.subr.bf16.mxu0 0
        %1048 = vmatpush1.bf16.msra.mxu0 %v887
        %1049 = vmatprep.subr.bf16.mxu0 0
        %1050 = vmatpush1.bf16.msra.mxu0 %v888
        %1051 = vmatprep.subr.bf16.mxu0 0
        %1052 = vmatpush1.bf16.msra.mxu0 %v889
        %1053 = vmatprep.subr.bf16.mxu0 0
        %1054 = vmatpush1.bf16.msra.mxu0 %v890
        %1055 = vmatprep.subr.bf16.mxu0 0
        %1056 = vmatpush1.bf16.msra.mxu0 %v891
        %1057 = vmatprep.subr.bf16.mxu0 0
        %1058 = vmatpush1.bf16.msra.mxu0 %v892
        %1059 = vmatprep.subr.bf16.mxu0 0
        %1060 = vmatpush1.bf16.msra.mxu0 %v893
        %1061 = vmatprep.subr.bf16.mxu0 0
        %1062 = vmatpush1.bf16.msra.mxu0 %v894
        %1063 = vmatprep.mubr.bf16.mxu0 %v413
        %1064 = vmatmul.mubr.bf16.gmra.mrb[0].mxu0 %v412
        %v1065 = vpop.f32.mrb[0].mxu0
        %v1066 = vadd.f32 %v1026, %v1065
        %v1067 = vpop.f32.mrb[0].mxu0
        %v1068 = vpop.f32.mrb[0].mxu0
        %v1069 = vpop.f32.mrb[0].mxu0
        %1070 = vdwg.mxu0
        %1071 = vmatprep.subr.bf16.mxu0 0
        %1072 = vmatpush1.bf16.msra.mxu0 %v895
        %1073 = vmatprep.subr.bf16.mxu0 0
        %1074 = vmatpush1.bf16.msra.mxu0 %v896
        %1075 = vmatprep.subr.bf16.mxu0 0
        %1076 = vmatpush1.bf16.msra.mxu0 %v897
        %1077 = vmatprep.subr.bf16.mxu0 0
        %1078 = vmatpush1.bf16.msra.mxu0 %v898
        %1079 = vmatprep.subr.bf16.mxu0 0
        %1080 = vmatpush1.bf16.msra.mxu0 %v899
        %1081 = vmatprep.subr.bf16.mxu0 0
        %1082 = vmatpush1.bf16.msra.mxu0 %v900
        %1083 = vmatprep.subr.bf16.mxu0 0
        %1084 = vmatpush1.bf16.msra.mxu0 %v901
        %1085 = vmatprep.subr.bf16.mxu0 0
        %1086 = vmatpush1.bf16.msra.mxu0 %v902
        %1087 = vmatprep.subr.bf16.mxu0 0
        %1088 = vmatpush1.bf16.msra.mxu0 %v903
        %1089 = vmatprep.subr.bf16.mxu0 0
        %1090 = vmatpush1.bf16.msra.mxu0 %v904
        %1091 = vmatprep.subr.bf16.mxu0 0
        %1092 = vmatpush1.bf16.msra.mxu0 %v905
        %1093 = vmatprep.subr.bf16.mxu0 0
        %1094 = vmatpush1.bf16.msra.mxu0 %v906
        %1095 = vmatprep.subr.bf16.mxu0 0
        %1096 = vmatpush1.bf16.msra.mxu0 %v907
        %1097 = vmatprep.subr.bf16.mxu0 0
        %1098 = vmatpush1.bf16.msra.mxu0 %v908
        %1099 = vmatprep.subr.bf16.mxu0 0
        %1100 = vmatpush1.bf16.msra.mxu0 %v909
        %1101 = vmatprep.subr.bf16.mxu0 0
        %1102 = vmatpush1.bf16.msra.mxu0 %v910
        %1103 = vmatprep.mubr.bf16.mxu0 %v415
        %1104 = vmatmul.mubr.bf16.gmra.mrb[0].mxu0 %v414
        %v1105 = vpop.f32.mrb[0].mxu0
        %v1106 = vadd.f32 %v1066, %v1105
        %v1107 = vpop.f32.mrb[0].mxu0
        %v1108 = vpop.f32.mrb[0].mxu0
        %v1109 = vpop.f32.mrb[0].mxu0
        %1110 = vdwg.mxu0
        %1111 = vmatprep.subr.bf16.mxu0 0
        %1112 = vmatpush1.bf16.msra.mxu0 %v911
        %1113 = vmatprep.subr.bf16.mxu0 0
        %1114 = vmatpush1.bf16.msra.mxu0 %v912
        %1115 = vmatprep.subr.bf16.mxu0 0
        %1116 = vmatpush1.bf16.msra.mxu0 %v913
        %1117 = vmatprep.subr.bf16.mxu0 0
        %1118 = vmatpush1.bf16.msra.mxu0 %v914
        %1119 = vmatprep.subr.bf16.mxu0 0
        %1120 = vmatpush1.bf16.msra.mxu0 %v915
        %1121 = vmatprep.subr.bf16.mxu0 0
        %1122 = vmatpush1.bf16.msra.mxu0 %v916
        %1123 = vmatprep.subr.bf16.mxu0 0
        %1124 = vmatpush1.bf16.msra.mxu0 %v917
        %1125 = vmatprep.subr.bf16.mxu0 0
        %1126 = vmatpush1.bf16.msra.mxu0 %v918
        %1127 = vmatprep.subr.bf16.mxu0 0
        %1128 = vmatpush1.bf16.msra.mxu0 %v919
        %1129 = vmatprep.subr.bf16.mxu0 0
        %1130 = vmatpush1.bf16.msra.mxu0 %v920
        %1131 = vmatprep.subr.bf16.mxu0 0
        %1132 = vmatpush1.bf16.msra.mxu0 %v921
        %1133 = vmatprep.subr.bf16.mxu0 0
        %1134 = vmatpush1.bf16.msra.mxu0 %v922
        %1135 = vmatprep.subr.bf16.mxu0 0
        %1136 = vmatpush1.bf16.msra.mxu0 %v923
        %1137 = vmatprep.subr.bf16.mxu0 0
        %1138 = vmatpush1.bf16.msra.mxu0 %v924
        %1139 = vmatprep.subr.bf16.mxu0 0
        %1140 = vmatpush1.bf16.msra.mxu0 %v925
        %1141 = vmatprep.subr.bf16.mxu0 0
        %1142 = vmatpush1.bf16.msra.mxu0 %v926
        %1143 = vmatprep.mubr.bf16.mxu0 %v417
        %1144 = vmatmul.mubr.bf16.gmra.mrb[0].mxu0 %v416
        %v1145 = vpop.f32.mrb[0].mxu0
        %v1146 = vadd.f32 %v1106, %v1145
        %v1147 = vpop.f32.mrb[0].mxu0
        %v1148 = vpop.f32.mrb[0].mxu0
        %v1149 = vpop.f32.mrb[0].mxu0
        %1150 = vdwg.mxu0
        %v1151 = vlaneseq
        %v1152 = vshrl.u32 %v1151, 7
        %v1153 = vsub.s32 0, %v1152
        %v1154 = vrot.slane %v363, %v1153
        %v1155 = vadd.f32 %v1146, %v1154
        %v1156 = vxor.u32 %v1155, 2147483648
        %v1157 = vmul.f32 %v1156, 1.442695
        %v1158 = vpow.pop %v1157
        %v1159 = vadd.f32 %v1158, 1.0
        %v1160 = vrcp.pop %v1159
        %v1161 = vmul.f32 1.0, %v1160
        %v1162 = vtanh.pop %v1155
        %1164 = vrot.lane.b32.xlu0 %v360, 32
        %v1165 = vpop.permute.xlu0 %1164
        %v1167 = vmul.f32 %v1161, %v1165
        %1169 = vrot.lane.b32.xlu0 %v1162, 64
        %v1170 = vpop.permute.xlu0 %1169
        %v1172 = vmul.f32 %v1161, %v1170
        %1174 = vrot.lane.b32.xlu0 %v1172, 32
        %v1175 = vpop.permute.xlu0 %1174
        %v1177 = vadd.f32 %v1167, %v1175
        %v1178 = vtanh.pop %v1177
        %1180 = vrot.lane.b32.xlu0 %v1178, 64
        %v1181 = vpop.permute.xlu0 %1180
        %v1183 = vmul.f32 %v1161, %v1181
        %v1184 = vlaneseq
        %v1185 = vshrl.u32 %v1184, 7
        %v1186 = vsub.s32 0, %v1185
        %v1187 = vrot.slane %v364, %v1186
        %1189 = vrot.lane.b32.xlu0 %v1187, 96
        %v1190 = vpop.permute.xlu0 %1189
        %v1192 = vmul.f32 %v1183, %v1190
        %1194 = vrot.lane.b32.xlu0 %v1192, 32
        %v1195 = vpop.permute.xlu0 %1194
        %vm1197 = vcmask 254976
        %v1198 = vsel %vm1197, %v1195, 0.0
        %1199 = vadd.xlane.f32.xlu0 %v1198
        %v1200 = vpop.xlane.xlu0 %1199
        %v1201 = vlaneseq
        %v1202 = vshrl.u32 %v1201, 7
        %v1203 = vsub.s32 0, %v1202
        %v1204 = vrot.slane %v365, %v1203
        %v1205 = vadd.f32 %v1200, %v1204
        %v1206 = vxor.u32 %v1205, 2147483648
        %v1207 = vmul.f32 %v1206, 1.442695
        %v1208 = vpow.pop %v1207
        %v1209 = vadd.f32 %v1208, 1.0
        %v1210 = vrcp.pop %v1209
        %v1211 = vmul.f32 1.0, %v1210
        %v1212 = vsub.f32 1.0, %v1211
        %vm1213 = vcmask 1024
        %1214 = vst.msk [vmem:[%s343] sm:$0x3] %vm1213, %v1212
        %1216 = vrot.lane.b32.xlu0 %v1211, 1
        %v1217 = vpop.permute.xlu0 %1216
        %vm1219 = vcmask 9224
        %1220 = vst.msk [vmem:[%s343] sm:$0x3] %vm1219, %v1217
        %vm1221 = vcmp.gt.f32.partialorder %v1211, 0.5
        %v1222 = vsel %vm1221, 1, 0
        %v1223 = vcvt.s32.f32 %v1222
        %1224 = vst.msk [vmem:[%s347] sm:$0x3] %vm1213, %v1223
        %1226 = vrot.lane.b32.xlu0 %v1183, 32
        %v1227 = vpop.permute.xlu0 %1226
        %1229 = vst.msk [vmem:[#allocation10] sm:$0x3] %vm1197, %v1227
        %1231 = vrot.lane.b32.xlu0 %v1177, 96
        %v1232 = vpop.permute.xlu0 %1231
        %1234 = vst.msk [vmem:[%s359] sm:$0x3] %vm1197, %v1232
        %p1235 = scmp.lt.s32.totalorder %s25, 7
        %s1236 = scalar_select %p1235, %s25, 7
        %s1237 = smul.addr %s1236, 2
        %s1238 = scalar_lea.vmem %s5, %s1237
        %p1239 = scmp.lt.s32.totalorder %s25, 7
        %s1240 = scalar_select %p1239, %s25, 7
        %s1241 = smul.addr %s1240, 2
        %s1242 = scalar_lea.vmem %s6, %s1241
        // Predicated region
        $region61: #{tpu_custom_call.1} parent=39 // pred_check
          %p1243 = pneg %p153
        $region62: #{tpu_custom_call.1} parent=39 // pred_check_branch
          %1245 = sbr.rel (%p1243) target = $region64
        $region63: #{tpu_custom_call.1} parent=39 // pred_region
          _
        $region64: #{tpu_custom_call.1} parent=39 // pred_fallthru
          _
        // Predicated region
        $region65: #{tpu_custom_call.1} parent=39 // pred_check
          %p1246 = pneg %p179
        $region66: #{tpu_custom_call.1} parent=39 // pred_check_branch
          %1248 = sbr.rel (%p1246) target = $region68
        $region67: #{tpu_custom_call.1} parent=39 // pred_region
          _
        $region68: #{tpu_custom_call.1} parent=39 // pred_fallthru
          _
        // Predicated region
        $region69: #{tpu_custom_call.1} parent=39 // pred_check
          %p1249 = pneg %p200
        $region70: #{tpu_custom_call.1} parent=39 // pred_check_branch
          %1251 = sbr.rel (%p1249) target = $region72
        $region71: #{tpu_custom_call.1} parent=39 // pred_region
          %s1253 = ssub.s32 64, 64
          %1254 = vsyncadd [#allocation4], %s1253
          %s1255 = sshll.u32 [#allocation10], 4
          %s1256 = int_to_ptr.vmem [resolvable:$true] %s1255
          %1261 = dma.vmem_to_hbm [thread:$0]  %s1256, 64, %s7, [#allocation4], 32, 32, 2
        $region72: #{tpu_custom_call.1} parent=39 // pred_fallthru
          _
        // Predicated region
        $region73: #{tpu_custom_call.1} parent=39 // pred_check
          %p1262 = pneg %p200
        $region74: #{tpu_custom_call.1} parent=39 // pred_check_branch
          %1264 = sbr.rel (%p1262) target = $region76
        $region75: #{tpu_custom_call.1} parent=39 // pred_region
          %1265 = dma.done [#allocation4], 64
        $region76: #{tpu_custom_call.1} parent=39 // pred_fallthru
          _
      $region40: #{tpu_custom_call.1} parent=5 // pred_fallthru
        _
      %p1266 = scmp.le.s32.totalorder 2, %s20
      // Predicated region
      $region77: #{tpu_custom_call.1} parent=5 // pred_check
        %p1267 = pneg %p1266
      $region78: #{tpu_custom_call.1} parent=5 // pred_check_branch
        %1269 = sbr.rel (%p1267) target = $region80
      $region79: #{tpu_custom_call.1} parent=5 // pred_region
        %s1270 = ssub.s32 %s20, 2
        // Predicated region
        $region81: #{tpu_custom_call.1} parent=79 // pred_check
          %p1271 = pneg %p159
        $region82: #{tpu_custom_call.1} parent=79 // pred_check_branch
          %1273 = sbr.rel (%p1271) target = $region84
        $region83: #{tpu_custom_call.1} parent=79 // pred_region
          %p1274 = scmp.lt.s32.totalorder %s26, 7
          %s1275 = scalar_select %p1274, %s26, 7
          %s1276 = smul.addr %s1275, 2
          %s1277 = scalar_lea.vmem %s5, %s1276
        $region84: #{tpu_custom_call.1} parent=79 // pred_fallthru
          _
        // Predicated region
        $region85: #{tpu_custom_call.1} parent=79 // pred_check
          %p1278 = pneg %p185
        $region86: #{tpu_custom_call.1} parent=79 // pred_check_branch
          %1280 = sbr.rel (%p1278) target = $region88
        $region87: #{tpu_custom_call.1} parent=79 // pred_region
          %p1281 = scmp.lt.s32.totalorder %s26, 7
          %s1282 = scalar_select %p1281, %s26, 7
          %s1283 = smul.addr %s1282, 2
          %s1284 = scalar_lea.vmem %s6, %s1283
        $region88: #{tpu_custom_call.1} parent=79 // pred_fallthru
          _
      $region80: #{tpu_custom_call.1} parent=5 // pred_fallthru
        _
    $region6: #{tpu_custom_call.1} parent=1 // loop_footer
      %s24 = sadd.s32 1, %s20
    $region7: #{tpu_custom_call.1} parent=1 // loop_footer_branch
      %19 = sbr.rel target = $region3
    $region8: #{tpu_custom_call.1} parent=1 // loop_exit
      _
    %1285 = vsyncpa [#allocation3], 1
    %s1286 = scalar_lea.sflag [#allocation3], 1
    %1287 = vsyncpa %s1286, 1
    %1288 = vsyncpa [#allocation6], 1
    %1289 = vsyncpa [#allocation9], 1
    %1290 = vsyncpa [#allocation4], 1
    %s1291 = scalar_lea.sflag [#allocation4], 1
    %1292 = vsyncpa %s1291, 1

</llo_original>
